<compile_context>
chip_gen: v6e
topology: v6e:2x2x1
jax: 0.10.0
libtpu: 0.0.40
codegen_flags: <defaults>
</compile_context>

<pallas_src>
import numpy as np
import jax
import jax.numpy as jnp
from jax.experimental import pallas as pl
from jax.experimental.pallas import tpu as pltpu


IN_F = 48 * 4 * 4      # 768
HID = 100
OUT_F = 10

LANE = 128
SUBLANE = 8


def _round_up(n, m):
    return ((n + m - 1) // m) * m


def _pad2d(x, rows, cols):
    r, c = x.shape
    return jnp.pad(x, ((0, rows - r), (0, cols - c)))


# ----------------------------- Pallas kernel --------------------------------

def mlp_kernel(x_ref, w1_ref, b1_ref, w2_ref, b2_ref, w3_ref, b3_ref, o_ref):
    # All operands are full, padded VMEM tiles; three MXU matmuls back-to-back
    # with VPU bias/relu epilogues, no intermediate HBM traffic.
    h1 = (jnp.dot(x_ref[...], w1_ref[...], preferred_element_type=jnp.float32)
          + b1_ref[...])
    h1 = jnp.maximum(h1, 0.0)                       # relu(fc1)
    # F.dropout -> identity (eval mode), see TODO above.
    h2 = (jnp.dot(h1, w2_ref[...], preferred_element_type=jnp.float32)
          + b2_ref[...])
    h2 = jnp.maximum(h2, 0.0)                       # relu(fc2)
    o_ref[...] = (jnp.dot(h2, w3_ref[...], preferred_element_type=jnp.float32)
                  + b3_ref[...])                    # fc3 (logits)


# ----------------------------- wrapper ---------------------------------------

def mnist_classifier_forward(x, params):
    """Forward equivalent to MNIST_Classfier.forward (eval-mode dropout).

    x: (B, 768) float32.
    params: torch-style (w1 (100,768), b1 (100,), w2 (100,100), b2 (100,),
                         w3 (10,100),  b3 (10,)).
    """
    w1, b1, w2, b2, w3, b3 = params
    B, K = x.shape
    assert K == IN_F, (B, K)

    Mp = _round_up(B, SUBLANE)       # pad batch to sublane multiple
    Kp = _round_up(K, LANE)          # 768 (already aligned)
    Hp = _round_up(HID, LANE)        # 128 -> lane-dense hidden
    Op = _round_up(OUT_F, LANE)      # 128 -> lane-dense output (unmasked vst)

    xp = _pad2d(x, Mp, Kp)
    w1p = _pad2d(w1.T, Kp, Hp)                       # (768, 128)
    w2p = _pad2d(w2.T, Hp, Hp)                       # (128, 128)
    w3p = _pad2d(w3.T, Hp, Op)                       # (128, 128)
    b1p = _pad2d(b1.reshape(1, -1), 1, Hp)
    b2p = _pad2d(b2.reshape(1, -1), 1, Hp)
    b3p = _pad2d(b3.reshape(1, -1), 1, Op)

    out = pl.pallas_call(
        mlp_kernel,
        out_shape=jax.ShapeDtypeStruct((Mp, Op), jnp.float32),
        grid_spec=pltpu.PrefetchScalarGridSpec(
            num_scalar_prefetch=0,
            grid=(1,),                               # everything resident; one step
            in_specs=[
                pl.BlockSpec((Mp, Kp), lambda i: (0, 0)),
                pl.BlockSpec((Kp, Hp), lambda i: (0, 0)),
                pl.BlockSpec((1, Hp), lambda i: (0, 0)),
                pl.BlockSpec((Hp, Hp), lambda i: (0, 0)),
                pl.BlockSpec((1, Hp), lambda i: (0, 0)),
                pl.BlockSpec((Hp, Op), lambda i: (0, 0)),
                pl.BlockSpec((1, Op), lambda i: (0, 0)),
            ],
            out_specs=pl.BlockSpec((Mp, Op), lambda i: (0, 0)),
        ),
        compiler_params=pltpu.CompilerParams(
            dimension_semantics=("arbitrary",)),
    )(xp, w1p, b1p, w2p, b2p, w3p, b3p)

    return out[:B, :OUT_F]


# ----------------------------- reference (pure JAX) --------------------------

def reference_forward(x, params):
    w1, b1, w2, b2, w3, b3 = params
    h = jnp.maximum(x @ w1.T + b1, 0.0)
    h = jnp.maximum(h @ w2.T + b2, 0.0)      # dropout == identity (eval)
    return h @ w3.T + b3


# ----------------------------- main ------------------------------------------

if __name__ == "__main__":
    key = jax.random.PRNGKey(0)
    kx, k1, k2, k3, k4, k5, k6 = jax.random.split(key, 7)

    # Deterministic parameter init (PyTorch Linear-style uniform bounds).
    bnd1 = 1.0 / np.sqrt(IN_F)
    w1 = jax.random.uniform(k1, (HID, IN_F), jnp.float32, -bnd1, bnd1)
    b1 = jax.random.uniform(k2, (HID,), jnp.float32, -bnd1, bnd1)

    bnd2 = 1.0 / np.sqrt(HID)
    w2 = jax.random.uniform(k3, (HID, HID), jnp.float32, -bnd2, bnd2)
    b2 = jax.random.uniform(k4, (HID,), jnp.float32, -bnd2, bnd2)

    bnd3 = 1.0 / np.sqrt(HID)
    w3 = jax.random.uniform(k5, (OUT_F, HID), jnp.float32, -bnd3, bnd3)
    b3 = jax.random.uniform(k6, (OUT_F,), jnp.float32, -bnd3, bnd3)

    params = (w1, b1, w2, b2, w3, b3)

    # Input: flattened 48*4*4 features (output of the MNIST extractor), batch=2.
    x = jax.random.normal(kx, (2, IN_F), jnp.float32)

    out = jax.block_until_ready(mnist_classifier_forward(x, params))
    ref = jax.block_until_ready(reference_forward(x, params))

    assert out.shape == (2, OUT_F), out.shape
    assert np.allclose(np.asarray(out), np.asarray(ref), rtol=1e-3, atol=1e-3), (
        "mismatch vs reference")

    print("KERNEL_OK")
</pallas_src>

<mosaic_0001>
module attributes {stable_mosaic.version = 11 : i64} {
  func.func @mlp_kernel(%arg0: i32, %arg1: memref<8x768xf32, #tpu.memory_space<vmem>>, %arg2: memref<768x128xf32, #tpu.memory_space<vmem>>, %arg3: memref<1x128xf32, #tpu.memory_space<vmem>>, %arg4: memref<128x128xf32, #tpu.memory_space<vmem>>, %arg5: memref<1x128xf32, #tpu.memory_space<vmem>>, %arg6: memref<128x128xf32, #tpu.memory_space<vmem>>, %arg7: memref<1x128xf32, #tpu.memory_space<vmem>>, %arg8: memref<8x128xf32, #tpu.memory_space<vmem>>) attributes {dimension_semantics = [#tpu.dimension_semantics<arbitrary>], iteration_bounds = array<i64: 1>, scalar_prefetch = 0 : i64, scratch_operands = 0 : i64, tpu.core_type = #tpu.core_type<tc>, window_params = [{pipeline_mode = #tpu.pipeline_mode<synchronous>, transform_indices = @transform_0, window_bounds = array<i64: 8, 768>}, {pipeline_mode = #tpu.pipeline_mode<synchronous>, transform_indices = @transform_1, window_bounds = array<i64: 768, 128>}, {pipeline_mode = #tpu.pipeline_mode<synchronous>, transform_indices = @transform_2, window_bounds = array<i64: 1, 128>}, {pipeline_mode = #tpu.pipeline_mode<synchronous>, transform_indices = @transform_3, window_bounds = array<i64: 128, 128>}, {pipeline_mode = #tpu.pipeline_mode<synchronous>, transform_indices = @transform_4, window_bounds = array<i64: 1, 128>}, {pipeline_mode = #tpu.pipeline_mode<synchronous>, transform_indices = @transform_5, window_bounds = array<i64: 128, 128>}, {pipeline_mode = #tpu.pipeline_mode<synchronous>, transform_indices = @transform_6, window_bounds = array<i64: 1, 128>}, {pipeline_mode = #tpu.pipeline_mode<synchronous>, transform_indices = @transform_7, window_bounds = array<i64: 8, 128>}]} {
    %c0 = arith.constant 0 : index
    %c0_0 = arith.constant 0 : index
    %0 = vector.load %arg1[%c0, %c0_0] : memref<8x768xf32, #tpu.memory_space<vmem>>, vector<8x768xf32>
    %c0_1 = arith.constant 0 : index
    %c0_2 = arith.constant 0 : index
    %1 = vector.load %arg2[%c0_1, %c0_2] : memref<768x128xf32, #tpu.memory_space<vmem>>, vector<768x128xf32>
    %cst = arith.constant dense<0.000000e+00> : vector<8x128xf32>
    %2 = tpu.matmul %0, %1, %cst {dimension_numbers = #tpu.dot_dimension_numbers<[1], [0], [0], [1], [0, 0, 1, 1], [], []>} : vector<8x768xf32>, vector<768x128xf32>, vector<8x128xf32> -> vector<8x128xf32>
    %c0_3 = arith.constant 0 : index
    %c0_4 = arith.constant 0 : index
    %3 = vector.load %arg3[%c0_3, %c0_4] : memref<1x128xf32, #tpu.memory_space<vmem>>, vector<1x128xf32>
    %4 = vector.broadcast %3 : vector<1x128xf32> to vector<8x128xf32>
    %5 = arith.addf %2, %4 : vector<8x128xf32>
    %cst_5 = arith.constant 0.000000e+00 : f32
    %6 = vector.broadcast %cst_5 : f32 to vector<8x128xf32>
    %7 = arith.maximumf %5, %6 : vector<8x128xf32>
    %c0_6 = arith.constant 0 : index
    %c0_7 = arith.constant 0 : index
    %8 = vector.load %arg4[%c0_6, %c0_7] : memref<128x128xf32, #tpu.memory_space<vmem>>, vector<128x128xf32>
    %cst_8 = arith.constant dense<0.000000e+00> : vector<8x128xf32>
    %9 = tpu.matmul %7, %8, %cst_8 {dimension_numbers = #tpu.dot_dimension_numbers<[1], [0], [0], [1], [0, 0, 1, 1], [], []>} : vector<8x128xf32>, vector<128x128xf32>, vector<8x128xf32> -> vector<8x128xf32>
    %c0_9 = arith.constant 0 : index
    %c0_10 = arith.constant 0 : index
    %10 = vector.load %arg5[%c0_9, %c0_10] : memref<1x128xf32, #tpu.memory_space<vmem>>, vector<1x128xf32>
    %11 = vector.broadcast %10 : vector<1x128xf32> to vector<8x128xf32>
    %12 = arith.addf %9, %11 : vector<8x128xf32>
    %cst_11 = arith.constant 0.000000e+00 : f32
    %13 = vector.broadcast %cst_11 : f32 to vector<8x128xf32>
    %14 = arith.maximumf %12, %13 : vector<8x128xf32>
    %c0_12 = arith.constant 0 : index
    %c0_13 = arith.constant 0 : index
    %15 = vector.load %arg6[%c0_12, %c0_13] : memref<128x128xf32, #tpu.memory_space<vmem>>, vector<128x128xf32>
    %cst_14 = arith.constant dense<0.000000e+00> : vector<8x128xf32>
    %16 = tpu.matmul %14, %15, %cst_14 {dimension_numbers = #tpu.dot_dimension_numbers<[1], [0], [0], [1], [0, 0, 1, 1], [], []>} : vector<8x128xf32>, vector<128x128xf32>, vector<8x128xf32> -> vector<8x128xf32>
    %c0_15 = arith.constant 0 : index
    %c0_16 = arith.constant 0 : index
    %17 = vector.load %arg7[%c0_15, %c0_16] : memref<1x128xf32, #tpu.memory_space<vmem>>, vector<1x128xf32>
    %18 = vector.broadcast %17 : vector<1x128xf32> to vector<8x128xf32>
    %19 = arith.addf %16, %18 : vector<8x128xf32>
    %c0_17 = arith.constant 0 : index
    %c0_18 = arith.constant 0 : index
    %20 = vector.load %arg8[%c0_17, %c0_18] : memref<8x128xf32, #tpu.memory_space<vmem>>, vector<8x128xf32>
    tpu.vector_store %arg8[%c0_17, %c0_18], %19 {strides = array<i32>} : memref<8x128xf32, #tpu.memory_space<vmem>>, vector<8x128xf32>,
    return
  }
  func.func @transform_0(%arg0: i32) -> (i32, i32) {
    %c0_i32 = arith.constant 0 : i32
    %c0_i32_0 = arith.constant 0 : i32
    %c0_i32_1 = arith.constant 0 : i32
    return %c0_i32, %c0_i32_0 : i32, i32
  }
  func.func @transform_1(%arg0: i32) -> (i32, i32) {
    %c0_i32 = arith.constant 0 : i32
    %c0_i32_0 = arith.constant 0 : i32
    %c0_i32_1 = arith.constant 0 : i32
    return %c0_i32, %c0_i32_0 : i32, i32
  }
  func.func @transform_2(%arg0: i32) -> (i32, i32) {
    %c0_i32 = arith.constant 0 : i32
    %c0_i32_0 = arith.constant 0 : i32
    %c0_i32_1 = arith.constant 0 : i32
    return %c0_i32, %c0_i32_0 : i32, i32
  }
  func.func @transform_3(%arg0: i32) -> (i32, i32) {
    %c0_i32 = arith.constant 0 : i32
    %c0_i32_0 = arith.constant 0 : i32
    %c0_i32_1 = arith.constant 0 : i32
    return %c0_i32, %c0_i32_0 : i32, i32
  }
  func.func @transform_4(%arg0: i32) -> (i32, i32) {
    %c0_i32 = arith.constant 0 : i32
    %c0_i32_0 = arith.constant 0 : i32
    %c0_i32_1 = arith.constant 0 : i32
    return %c0_i32, %c0_i32_0 : i32, i32
  }
  func.func @transform_5(%arg0: i32) -> (i32, i32) {
    %c0_i32 = arith.constant 0 : i32
    %c0_i32_0 = arith.constant 0 : i32
    %c0_i32_1 = arith.constant 0 : i32
    return %c0_i32, %c0_i32_0 : i32, i32
  }
  func.func @transform_6(%arg0: i32) -> (i32, i32) {
    %c0_i32 = arith.constant 0 : i32
    %c0_i32_0 = arith.constant 0 : i32
    %c0_i32_1 = arith.constant 0 : i32
    return %c0_i32, %c0_i32_0 : i32, i32
  }
  func.func @transform_7(%arg0: i32) -> (i32, i32) {
    %c0_i32 = arith.constant 0 : i32
    %c0_i32_0 = arith.constant 0 : i32
    %c0_i32_1 = arith.constant 0 : i32
    return %c0_i32, %c0_i32_0 : i32, i32
  }
}

</mosaic_0001>

<llo_original>
// kernel: tpu_custom_call.1
$region0: #{tpu_custom_call.1}
  #allocation0 [shape = 'u32[]', space=smem, size = 0x4, offset = 0x4, fixed_abs, tag = 'smem constant byte address 0x4 - core index']
  #allocation1 [shape = 'u32[144,128]{1,0:T(1,128)}', space=vmem, size = 0x12000, scoped, tag = 'internal scratch']
  %s0 = inlined_call_operand.hbm [shape: f32[8,768], index: 0, kind: input, shape index: {}]
  %s1 = inlined_call_operand.hbm [shape: f32[768,128], index: 1, kind: input, shape index: {}]
  %s2 = inlined_call_operand.vmem [shape: f32[1,128], index: 2, kind: input, shape index: {}]
  %s3 = inlined_call_operand.hbm [shape: f32[128,128], index: 3, kind: input, shape index: {}]
  %s4 = inlined_call_operand.vmem [shape: f32[1,128], index: 4, kind: input, shape index: {}]
  %s5 = inlined_call_operand.hbm [shape: f32[128,128], index: 5, kind: input, shape index: {}]
  %s6 = inlined_call_operand.vmem [shape: f32[1,128], index: 6, kind: input, shape index: {}]
  %s7 = inlined_call_operand.hbm [shape: f32[8,128], index: 7, kind: output, shape index: {}]
  %s8 = sld [smem:[#allocation0]]
  $region54: #{tpu_custom_call.1} parent=0
    _
  %s10 = ssub.s32 1, %s8
  %s11 = scalar_select 0, %s10, %s8
  $region1: #{tpu_custom_call.1} parent=0
    #allocation2 [shape = 'u8[24576]{0}', space=vmem, size = 0x6000, scoped, tag = 'input window, operand 0, single buffered']
    #allocation3 [shape = 's32[1]{0}', space=sflag, size = 0x4, scoped, tag = 'scoped memory for tpu_custom_call.1']
    #allocation4 [shape = 's32[1]{0}', space=sflag, size = 0x4, scoped, tag = 'scoped memory for tpu_custom_call.1']
    #allocation5 [shape = 'u8[393216]{0}', space=vmem, size = 0x60000, scoped, tag = 'input window, operand 1, single buffered']
    #allocation6 [shape = 's32[1]{0}', space=sflag, size = 0x4, scoped, tag = 'scoped memory for tpu_custom_call.1']
    #allocation7 [shape = 'u8[65536]{0}', space=vmem, size = 0x10000, scoped, tag = 'input window, operand 3, single buffered']
    #allocation8 [shape = 'u8[65536]{0}', space=vmem, size = 0x10000, scoped, tag = 'input window, operand 5, single buffered']
    #allocation9 [shape = 's32[1]{0}', space=sflag, size = 0x4, scoped, tag = 'scoped memory for tpu_custom_call.1']
    #allocation10 [shape = 'u8[4096]{0}', space=vmem, size = 0x1000, scoped, tag = 'output window, operand 0, single buffered']
    %12 = vsyncpa [#allocation3], 0
    %13 = vsyncpa [#allocation6], 0
    %14 = vsyncpa [#allocation9], 0
    %15 = vsyncpa [#allocation4], 0
    // Predicated region
    $region2: #{tpu_custom_call.1} parent=1 // pred_check
      _
    $region3: #{tpu_custom_call.1} parent=1 // pred_check_branch
      %17 = sbr.rel (0) target = $region5
    $region4: #{tpu_custom_call.1} parent=1 // pred_region
      %s19 = ssub.s32 768, 768
      %20 = vsyncadd [#allocation3], %s19
      %s22 = sshll.u32 [#allocation2], 4
      %s23 = int_to_ptr.vmem [resolvable:$true] %s22
      %25 = dma.hbm_to_vmem [thread:$0]  %s0, 768, %s23, [#allocation3]
    $region5: #{tpu_custom_call.1} parent=1 // pred_fallthru
      _
    // Predicated region
    $region6: #{tpu_custom_call.1} parent=1 // pred_check
      _
    $region7: #{tpu_custom_call.1} parent=1 // pred_check_branch
      %27 = sbr.rel (0) target = $region9
    $region8: #{tpu_custom_call.1} parent=1 // pred_region
      %s29 = ssub.s32 12288, 12288
      %30 = vsyncadd [#allocation6], %s29
      %s31 = sshll.u32 [#allocation5], 4
      %s32 = int_to_ptr.vmem [resolvable:$true] %s31
      %37 = dma.hbm_to_vmem [thread:$0]  %s1, 12288, %s32, [#allocation6], 128, 128, 8
    $region9: #{tpu_custom_call.1} parent=1 // pred_fallthru
      _
    // Predicated region
    $region10: #{tpu_custom_call.1} parent=1 // pred_check
      _
    $region11: #{tpu_custom_call.1} parent=1 // pred_check_branch
      %39 = sbr.rel (0) target = $region13
    $region12: #{tpu_custom_call.1} parent=1 // pred_region
      _
    $region13: #{tpu_custom_call.1} parent=1 // pred_fallthru
      _
    // Predicated region
    $region14: #{tpu_custom_call.1} parent=1 // pred_check
      _
    $region15: #{tpu_custom_call.1} parent=1 // pred_check_branch
      %41 = sbr.rel (0) target = $region17
    $region16: #{tpu_custom_call.1} parent=1 // pred_region
      %s43 = ssub.s32 2048, 2048
      %44 = vsyncadd [#allocation6], %s43
      %s45 = sshll.u32 [#allocation7], 4
      %s46 = int_to_ptr.vmem [resolvable:$true] %s45
      %51 = dma.hbm_to_vmem [thread:$0]  %s3, 2048, %s46, [#allocation6], 128, 128, 8
    $region17: #{tpu_custom_call.1} parent=1 // pred_fallthru
      _
    // Predicated region
    $region18: #{tpu_custom_call.1} parent=1 // pred_check
      _
    $region19: #{tpu_custom_call.1} parent=1 // pred_check_branch
      %53 = sbr.rel (0) target = $region21
    $region20: #{tpu_custom_call.1} parent=1 // pred_region
      _
    $region21: #{tpu_custom_call.1} parent=1 // pred_fallthru
      _
    // Predicated region
    $region22: #{tpu_custom_call.1} parent=1 // pred_check
      _
    $region23: #{tpu_custom_call.1} parent=1 // pred_check_branch
      %55 = sbr.rel (0) target = $region25
    $region24: #{tpu_custom_call.1} parent=1 // pred_region
      %s57 = ssub.s32 2048, 2048
      %58 = vsyncadd [#allocation9], %s57
      %s59 = sshll.u32 [#allocation8], 4
      %s60 = int_to_ptr.vmem [resolvable:$true] %s59
      %65 = dma.hbm_to_vmem [thread:$0]  %s5, 2048, %s60, [#allocation9], 128, 128, 8
    $region25: #{tpu_custom_call.1} parent=1 // pred_fallthru
      _
    // Predicated region
    $region26: #{tpu_custom_call.1} parent=1 // pred_check
      _
    $region27: #{tpu_custom_call.1} parent=1 // pred_check_branch
      %67 = sbr.rel (0) target = $region29
    $region28: #{tpu_custom_call.1} parent=1 // pred_region
      _
    $region29: #{tpu_custom_call.1} parent=1 // pred_fallthru
      _
    // Predicated region
    $region30: #{tpu_custom_call.1} parent=1 // pred_check
      _
    $region31: #{tpu_custom_call.1} parent=1 // pred_check_branch
      %69 = sbr.rel (0) target = $region33
    $region32: #{tpu_custom_call.1} parent=1 // pred_region
      %70 = dma.done [#allocation3], 768
    $region33: #{tpu_custom_call.1} parent=1 // pred_fallthru
      _
    // Predicated region
    $region34: #{tpu_custom_call.1} parent=1 // pred_check
      _
    $region35: #{tpu_custom_call.1} parent=1 // pred_check_branch
      %72 = sbr.rel (0) target = $region37
    $region36: #{tpu_custom_call.1} parent=1 // pred_region
      %73 = dma.done [#allocation6], 12288
    $region37: #{tpu_custom_call.1} parent=1 // pred_fallthru
      _
    // Predicated region
    $region38: #{tpu_custom_call.1} parent=1 // pred_check
      _
    $region39: #{tpu_custom_call.1} parent=1 // pred_check_branch
      %75 = sbr.rel (0) target = $region41
    $region40: #{tpu_custom_call.1} parent=1 // pred_region
      %76 = dma.done [#allocation6], 2048
    $region41: #{tpu_custom_call.1} parent=1 // pred_fallthru
      _
    // Predicated region
    $region42: #{tpu_custom_call.1} parent=1 // pred_check
      _
    $region43: #{tpu_custom_call.1} parent=1 // pred_check_branch
      %78 = sbr.rel (0) target = $region45
    $region44: #{tpu_custom_call.1} parent=1 // pred_region
      %79 = dma.done [#allocation9], 2048
    $region45: #{tpu_custom_call.1} parent=1 // pred_fallthru
      _
    %v80 = vld [vmem:[#allocation2] sm:$0xff]
    %v81 = vld [vmem:[#allocation2 + $0x8] sm:$0xff]
    %v82 = vld [vmem:[#allocation2 + $0x10] sm:$0xff]
    %v83 = vld [vmem:[#allocation2 + $0x18] sm:$0xff]
    %v84 = vld [vmem:[#allocation2 + $0x20] sm:$0xff]
    %v85 = vld [vmem:[#allocation2 + $0x28] sm:$0xff]
    %v86 = vld [vmem:[#allocation5] sm:$0xff]
    %v87 = vld [vmem:[#allocation5 + $0x8] sm:$0xff]
    %v88 = vld [vmem:[#allocation5 + $0x10] sm:$0xff]
    %v89 = vld [vmem:[#allocation5 + $0x18] sm:$0xff]
    %v90 = vld [vmem:[#allocation5 + $0x20] sm:$0xff]
    %v91 = vld [vmem:[#allocation5 + $0x28] sm:$0xff]
    %v92 = vld [vmem:[#allocation5 + $0x30] sm:$0xff]
    %v93 = vld [vmem:[#allocation5 + $0x38] sm:$0xff]
    %v94 = vld [vmem:[#allocation5 + $0x40] sm:$0xff]
    %v95 = vld [vmem:[#allocation5 + $0x48] sm:$0xff]
    %v96 = vld [vmem:[#allocation5 + $0x50] sm:$0xff]
    %v97 = vld [vmem:[#allocation5 + $0x58] sm:$0xff]
    %v98 = vld [vmem:[#allocation5 + $0x60] sm:$0xff]
    %v99 = vld [vmem:[#allocation5 + $0x68] sm:$0xff]
    %v100 = vld [vmem:[#allocation5 + $0x70] sm:$0xff]
    %v101 = vld [vmem:[#allocation5 + $0x78] sm:$0xff]
    %v102 = vld [vmem:[#allocation5 + $0x80] sm:$0xff]
    %v103 = vld [vmem:[#allocation5 + $0x88] sm:$0xff]
    %v104 = vld [vmem:[#allocation5 + $0x90] sm:$0xff]
    %v105 = vld [vmem:[#allocation5 + $0x98] sm:$0xff]
    %v106 = vld [vmem:[#allocation5 + $0xa0] sm:$0xff]
    %v107 = vld [vmem:[#allocation5 + $0xa8] sm:$0xff]
    %v108 = vld [vmem:[#allocation5 + $0xb0] sm:$0xff]
    %v109 = vld [vmem:[#allocation5 + $0xb8] sm:$0xff]
    %v110 = vld [vmem:[#allocation5 + $0xc0] sm:$0xff]
    %v111 = vld [vmem:[#allocation5 + $0xc8] sm:$0xff]
    %v112 = vld [vmem:[#allocation5 + $0xd0] sm:$0xff]
    %v113 = vld [vmem:[#allocation5 + $0xd8] sm:$0xff]
    %v114 = vld [vmem:[#allocation5 + $0xe0] sm:$0xff]
    %v115 = vld [vmem:[#allocation5 + $0xe8] sm:$0xff]
    %v116 = vld [vmem:[#allocation5 + $0xf0] sm:$0xff]
    %v117 = vld [vmem:[#allocation5 + $0xf8] sm:$0xff]
    %v118 = vld [vmem:[#allocation5 + $0x100] sm:$0xff]
    %v119 = vld [vmem:[#allocation5 + $0x108] sm:$0xff]
    %v120 = vld [vmem:[#allocation5 + $0x110] sm:$0xff]
    %v121 = vld [vmem:[#allocation5 + $0x118] sm:$0xff]
    %v122 = vld [vmem:[#allocation5 + $0x120] sm:$0xff]
    %v123 = vld [vmem:[#allocation5 + $0x128] sm:$0xff]
    %v124 = vld [vmem:[#allocation5 + $0x130] sm:$0xff]
    %v125 = vld [vmem:[#allocation5 + $0x138] sm:$0xff]
    %v126 = vld [vmem:[#allocation5 + $0x140] sm:$0xff]
    %v127 = vld [vmem:[#allocation5 + $0x148] sm:$0xff]
    %v128 = vld [vmem:[#allocation5 + $0x150] sm:$0xff]
    %v129 = vld [vmem:[#allocation5 + $0x158] sm:$0xff]
    %v130 = vld [vmem:[#allocation5 + $0x160] sm:$0xff]
    %v131 = vld [vmem:[#allocation5 + $0x168] sm:$0xff]
    %v132 = vld [vmem:[#allocation5 + $0x170] sm:$0xff]
    %v133 = vld [vmem:[#allocation5 + $0x178] sm:$0xff]
    %v134 = vld [vmem:[#allocation5 + $0x180] sm:$0xff]
    %v135 = vld [vmem:[#allocation5 + $0x188] sm:$0xff]
    %v136 = vld [vmem:[#allocation5 + $0x190] sm:$0xff]
    %v137 = vld [vmem:[#allocation5 + $0x198] sm:$0xff]
    %v138 = vld [vmem:[#allocation5 + $0x1a0] sm:$0xff]
    %v139 = vld [vmem:[#allocation5 + $0x1a8] sm:$0xff]
    %v140 = vld [vmem:[#allocation5 + $0x1b0] sm:$0xff]
    %v141 = vld [vmem:[#allocation5 + $0x1b8] sm:$0xff]
    %v142 = vld [vmem:[#allocation5 + $0x1c0] sm:$0xff]
    %v143 = vld [vmem:[#allocation5 + $0x1c8] sm:$0xff]
    %v144 = vld [vmem:[#allocation5 + $0x1d0] sm:$0xff]
    %v145 = vld [vmem:[#allocation5 + $0x1d8] sm:$0xff]
    %v146 = vld [vmem:[#allocation5 + $0x1e0] sm:$0xff]
    %v147 = vld [vmem:[#allocation5 + $0x1e8] sm:$0xff]
    %v148 = vld [vmem:[#allocation5 + $0x1f0] sm:$0xff]
    %v149 = vld [vmem:[#allocation5 + $0x1f8] sm:$0xff]
    %v150 = vld [vmem:[#allocation5 + $0x200] sm:$0xff]
    %v151 = vld [vmem:[#allocation5 + $0x208] sm:$0xff]
    %v152 = vld [vmem:[#allocation5 + $0x210] sm:$0xff]
    %v153 = vld [vmem:[#allocation5 + $0x218] sm:$0xff]
    %v154 = vld [vmem:[#allocation5 + $0x220] sm:$0xff]
    %v155 = vld [vmem:[#allocation5 + $0x228] sm:$0xff]
    %v156 = vld [vmem:[#allocation5 + $0x230] sm:$0xff]
    %v157 = vld [vmem:[#allocation5 + $0x238] sm:$0xff]
    %v158 = vld [vmem:[#allocation5 + $0x240] sm:$0xff]
    %v159 = vld [vmem:[#allocation5 + $0x248] sm:$0xff]
    %v160 = vld [vmem:[#allocation5 + $0x250] sm:$0xff]
    %v161 = vld [vmem:[#allocation5 + $0x258] sm:$0xff]
    %v162 = vld [vmem:[#allocation5 + $0x260] sm:$0xff]
    %v163 = vld [vmem:[#allocation5 + $0x268] sm:$0xff]
    %v164 = vld [vmem:[#allocation5 + $0x270] sm:$0xff]
    %v165 = vld [vmem:[#allocation5 + $0x278] sm:$0xff]
    %v166 = vld [vmem:[#allocation5 + $0x280] sm:$0xff]
    %v167 = vld [vmem:[#allocation5 + $0x288] sm:$0xff]
    %v168 = vld [vmem:[#allocation5 + $0x290] sm:$0xff]
    %v169 = vld [vmem:[#allocation5 + $0x298] sm:$0xff]
    %v170 = vld [vmem:[#allocation5 + $0x2a0] sm:$0xff]
    %v171 = vld [vmem:[#allocation5 + $0x2a8] sm:$0xff]
    %v172 = vld [vmem:[#allocation5 + $0x2b0] sm:$0xff]
    %v173 = vld [vmem:[#allocation5 + $0x2b8] sm:$0xff]
    %v174 = vld [vmem:[#allocation5 + $0x2c0] sm:$0xff]
    %v175 = vld [vmem:[#allocation5 + $0x2c8] sm:$0xff]
    %v176 = vld [vmem:[#allocation5 + $0x2d0] sm:$0xff]
    %v177 = vld [vmem:[#allocation5 + $0x2d8] sm:$0xff]
    %v178 = vld [vmem:[#allocation5 + $0x2e0] sm:$0xff]
    %v179 = vld [vmem:[#allocation5 + $0x2e8] sm:$0xff]
    %v180 = vld [vmem:[#allocation5 + $0x2f0] sm:$0xff]
    %v181 = vld [vmem:[#allocation5 + $0x2f8] sm:$0xff]
    %v182 = vld [vmem:[%s2] sm:$0x1]
    %v184 = vlaneseq
    %v185 = vshrl.u32 %v184, 7
    %v186 = vsub.s32 0, %v185
    %v187 = vrot.slane %v182, %v186
    %189 = vmatprep.subr.mxu0 0.0
    %190 = vmatpush1.msra.mxu0 %v101
    %191 = vmatprep.subr.mxu0 0.0
    %192 = vmatpush1.msra.mxu0 %v100
    %193 = vmatprep.subr.mxu0 0.0
    %194 = vmatpush1.msra.mxu0 %v99
    %195 = vmatprep.subr.mxu0 0.0
    %196 = vmatpush1.msra.mxu0 %v98
    %197 = vmatprep.subr.mxu0 0.0
    %198 = vmatpush1.msra.mxu0 %v97
    %199 = vmatprep.subr.mxu0 0.0
    %200 = vmatpush1.msra.mxu0 %v96
    %201 = vmatprep.subr.mxu0 0.0
    %202 = vmatpush1.msra.mxu0 %v95
    %203 = vmatprep.subr.mxu0 0.0
    %204 = vmatpush1.msra.mxu0 %v94
    %205 = vmatprep.subr.mxu0 0.0
    %206 = vmatpush1.msra.mxu0 %v93
    %207 = vmatprep.subr.mxu0 0.0
    %208 = vmatpush1.msra.mxu0 %v92
    %209 = vmatprep.subr.mxu0 0.0
    %210 = vmatpush1.msra.mxu0 %v91
    %211 = vmatprep.subr.mxu0 0.0
    %212 = vmatpush1.msra.mxu0 %v90
    %213 = vmatprep.subr.mxu0 0.0
    %214 = vmatpush1.msra.mxu0 %v89
    %215 = vmatprep.subr.mxu0 0.0
    %216 = vmatpush1.msra.mxu0 %v88
    %217 = vmatprep.subr.mxu0 0.0
    %218 = vmatpush1.msra.mxu0 %v87
    %219 = vmatprep.subr.mxu0 0.0
    %220 = vmatpush1.msra.mxu0 %v86
    %221 = vmatprep.subr.mxu0 0.0
    %222 = vmatpush2.msra.mxu0 %v117
    %223 = vmatprep.subr.mxu0 0.0
    %224 = vmatpush2.msra.mxu0 %v116
    %225 = vmatprep.subr.mxu0 0.0
    %226 = vmatpush2.msra.mxu0 %v115
    %227 = vmatprep.subr.mxu0 0.0
    %228 = vmatpush2.msra.mxu0 %v114
    %229 = vmatprep.subr.mxu0 0.0
    %230 = vmatpush2.msra.mxu0 %v113
    %231 = vmatprep.subr.mxu0 0.0
    %232 = vmatpush2.msra.mxu0 %v112
    %233 = vmatprep.subr.mxu0 0.0
    %234 = vmatpush2.msra.mxu0 %v111
    %235 = vmatprep.subr.mxu0 0.0
    %236 = vmatpush2.msra.mxu0 %v110
    %237 = vmatprep.subr.mxu0 0.0
    %238 = vmatpush2.msra.mxu0 %v109
    %239 = vmatprep.subr.mxu0 0.0
    %240 = vmatpush2.msra.mxu0 %v108
    %241 = vmatprep.subr.mxu0 0.0
    %242 = vmatpush2.msra.mxu0 %v107
    %243 = vmatprep.subr.mxu0 0.0
    %244 = vmatpush2.msra.mxu0 %v106
    %245 = vmatprep.subr.mxu0 0.0
    %246 = vmatpush2.msra.mxu0 %v105
    %247 = vmatprep.subr.mxu0 0.0
    %248 = vmatpush2.msra.mxu0 %v104
    %249 = vmatprep.subr.mxu0 0.0
    %250 = vmatpush2.msra.mxu0 %v103
    %251 = vmatprep.subr.mxu0 0.0
    %252 = vmatpush2.msra.mxu0 %v102
    %253 = vmatprep.mubr.f32.mxu0 %v81
    %254 = vmatmul.mubr.f32.gmra.mxu0 %v80
    %v255 = vpop.f32.mrf.mxu0
    %v256 = vadd.f32 %v187, %v255
    %v257 = vpop.f32.mrf.mxu0
    %258 = vdwg.mxu0
    %259 = vmatprep.subr.mxu0 0.0
    %260 = vmatpush1.msra.mxu0 %v133
    %261 = vmatprep.subr.mxu0 0.0
    %262 = vmatpush1.msra.mxu0 %v132
    %263 = vmatprep.subr.mxu0 0.0
    %264 = vmatpush1.msra.mxu0 %v131
    %265 = vmatprep.subr.mxu0 0.0
    %266 = vmatpush1.msra.mxu0 %v130
    %267 = vmatprep.subr.mxu0 0.0
    %268 = vmatpush1.msra.mxu0 %v129
    %269 = vmatprep.subr.mxu0 0.0
    %270 = vmatpush1.msra.mxu0 %v128
    %271 = vmatprep.subr.mxu0 0.0
    %272 = vmatpush1.msra.mxu0 %v127
    %273 = vmatprep.subr.mxu0 0.0
    %274 = vmatpush1.msra.mxu0 %v126
    %275 = vmatprep.subr.mxu0 0.0
    %276 = vmatpush1.msra.mxu0 %v125
    %277 = vmatprep.subr.mxu0 0.0
    %278 = vmatpush1.msra.mxu0 %v124
    %279 = vmatprep.subr.mxu0 0.0
    %280 = vmatpush1.msra.mxu0 %v123
    %281 = vmatprep.subr.mxu0 0.0
    %282 = vmatpush1.msra.mxu0 %v122
    %283 = vmatprep.subr.mxu0 0.0
    %284 = vmatpush1.msra.mxu0 %v121
    %285 = vmatprep.subr.mxu0 0.0
    %286 = vmatpush1.msra.mxu0 %v120
    %287 = vmatprep.subr.mxu0 0.0
    %288 = vmatpush1.msra.mxu0 %v119
    %289 = vmatprep.subr.mxu0 0.0
    %290 = vmatpush1.msra.mxu0 %v118
    %291 = vmatprep.subr.mxu0 0.0
    %292 = vmatpush2.msra.mxu0 %v149
    %293 = vmatprep.subr.mxu0 0.0
    %294 = vmatpush2.msra.mxu0 %v148
    %295 = vmatprep.subr.mxu0 0.0
    %296 = vmatpush2.msra.mxu0 %v147
    %297 = vmatprep.subr.mxu0 0.0
    %298 = vmatpush2.msra.mxu0 %v146
    %299 = vmatprep.subr.mxu0 0.0
    %300 = vmatpush2.msra.mxu0 %v145
    %301 = vmatprep.subr.mxu0 0.0
    %302 = vmatpush2.msra.mxu0 %v144
    %303 = vmatprep.subr.mxu0 0.0
    %304 = vmatpush2.msra.mxu0 %v143
    %305 = vmatprep.subr.mxu0 0.0
    %306 = vmatpush2.msra.mxu0 %v142
    %307 = vmatprep.subr.mxu0 0.0
    %308 = vmatpush2.msra.mxu0 %v141
    %309 = vmatprep.subr.mxu0 0.0
    %310 = vmatpush2.msra.mxu0 %v140
    %311 = vmatprep.subr.mxu0 0.0
    %312 = vmatpush2.msra.mxu0 %v139
    %313 = vmatprep.subr.mxu0 0.0
    %314 = vmatpush2.msra.mxu0 %v138
    %315 = vmatprep.subr.mxu0 0.0
    %316 = vmatpush2.msra.mxu0 %v137
    %317 = vmatprep.subr.mxu0 0.0
    %318 = vmatpush2.msra.mxu0 %v136
    %319 = vmatprep.subr.mxu0 0.0
    %320 = vmatpush2.msra.mxu0 %v135
    %321 = vmatprep.subr.mxu0 0.0
    %322 = vmatpush2.msra.mxu0 %v134
    %323 = vmatprep.mubr.f32.mxu0 %v83
    %324 = vmatmul.mubr.f32.gmra.mxu0 %v82
    %v325 = vpop.f32.mrf.mxu0
    %v326 = vadd.f32 %v256, %v325
    %v327 = vpop.f32.mrf.mxu0
    %328 = vdwg.mxu0
    %329 = vmatprep.subr.mxu0 0.0
    %330 = vmatpush1.msra.mxu0 %v165
    %331 = vmatprep.subr.mxu0 0.0
    %332 = vmatpush1.msra.mxu0 %v164
    %333 = vmatprep.subr.mxu0 0.0
    %334 = vmatpush1.msra.mxu0 %v163
    %335 = vmatprep.subr.mxu0 0.0
    %336 = vmatpush1.msra.mxu0 %v162
    %337 = vmatprep.subr.mxu0 0.0
    %338 = vmatpush1.msra.mxu0 %v161
    %339 = vmatprep.subr.mxu0 0.0
    %340 = vmatpush1.msra.mxu0 %v160
    %341 = vmatprep.subr.mxu0 0.0
    %342 = vmatpush1.msra.mxu0 %v159
    %343 = vmatprep.subr.mxu0 0.0
    %344 = vmatpush1.msra.mxu0 %v158
    %345 = vmatprep.subr.mxu0 0.0
    %346 = vmatpush1.msra.mxu0 %v157
    %347 = vmatprep.subr.mxu0 0.0
    %348 = vmatpush1.msra.mxu0 %v156
    %349 = vmatprep.subr.mxu0 0.0
    %350 = vmatpush1.msra.mxu0 %v155
    %351 = vmatprep.subr.mxu0 0.0
    %352 = vmatpush1.msra.mxu0 %v154
    %353 = vmatprep.subr.mxu0 0.0
    %354 = vmatpush1.msra.mxu0 %v153
    %355 = vmatprep.subr.mxu0 0.0
    %356 = vmatpush1.msra.mxu0 %v152
    %357 = vmatprep.subr.mxu0 0.0
    %358 = vmatpush1.msra.mxu0 %v151
    %359 = vmatprep.subr.mxu0 0.0
    %360 = vmatpush1.msra.mxu0 %v150
    %361 = vmatprep.subr.mxu0 0.0
    %362 = vmatpush2.msra.mxu0 %v181
    %363 = vmatprep.subr.mxu0 0.0
    %364 = vmatpush2.msra.mxu0 %v180
    %365 = vmatprep.subr.mxu0 0.0
    %366 = vmatpush2.msra.mxu0 %v179
    %367 = vmatprep.subr.mxu0 0.0
    %368 = vmatpush2.msra.mxu0 %v178
    %369 = vmatprep.subr.mxu0 0.0
    %370 = vmatpush2.msra.mxu0 %v177
    %371 = vmatprep.subr.mxu0 0.0
    %372 = vmatpush2.msra.mxu0 %v176
    %373 = vmatprep.subr.mxu0 0.0
    %374 = vmatpush2.msra.mxu0 %v175
    %375 = vmatprep.subr.mxu0 0.0
    %376 = vmatpush2.msra.mxu0 %v174
    %377 = vmatprep.subr.mxu0 0.0
    %378 = vmatpush2.msra.mxu0 %v173
    %379 = vmatprep.subr.mxu0 0.0
    %380 = vmatpush2.msra.mxu0 %v172
    %381 = vmatprep.subr.mxu0 0.0
    %382 = vmatpush2.msra.mxu0 %v171
    %383 = vmatprep.subr.mxu0 0.0
    %384 = vmatpush2.msra.mxu0 %v170
    %385 = vmatprep.subr.mxu0 0.0
    %386 = vmatpush2.msra.mxu0 %v169
    %387 = vmatprep.subr.mxu0 0.0
    %388 = vmatpush2.msra.mxu0 %v168
    %389 = vmatprep.subr.mxu0 0.0
    %390 = vmatpush2.msra.mxu0 %v167
    %391 = vmatprep.subr.mxu0 0.0
    %392 = vmatpush2.msra.mxu0 %v166
    %393 = vmatprep.mubr.f32.mxu0 %v85
    %394 = vmatmul.mubr.f32.gmra.mxu0 %v84
    %v395 = vpop.f32.mrf.mxu0
    %v396 = vadd.f32 %v326, %v395
    %v397 = vpop.f32.mrf.mxu0
    %398 = vdwg.mxu0
    %v399 = vmax.f32 %v396, 0.0
    %v400 = vld [vmem:[#allocation7] sm:$0xff]
    %v401 = vld [vmem:[#allocation7 + $0x8] sm:$0xff]
    %v402 = vld [vmem:[#allocation7 + $0x10] sm:$0xff]
    %v403 = vld [vmem:[#allocation7 + $0x18] sm:$0xff]
    %v404 = vld [vmem:[#allocation7 + $0x20] sm:$0xff]
    %v405 = vld [vmem:[#allocation7 + $0x28] sm:$0xff]
    %v406 = vld [vmem:[#allocation7 + $0x30] sm:$0xff]
    %v407 = vld [vmem:[#allocation7 + $0x38] sm:$0xff]
    %v408 = vld [vmem:[#allocation7 + $0x40] sm:$0xff]
    %v409 = vld [vmem:[#allocation7 + $0x48] sm:$0xff]
    %v410 = vld [vmem:[#allocation7 + $0x50] sm:$0xff]
    %v411 = vld [vmem:[#allocation7 + $0x58] sm:$0xff]
    %v412 = vld [vmem:[#allocation7 + $0x60] sm:$0xff]
    %v413 = vld [vmem:[#allocation7 + $0x68] sm:$0xff]
    %v414 = vld [vmem:[#allocation7 + $0x70] sm:$0xff]
    %v415 = vld [vmem:[#allocation7 + $0x78] sm:$0xff]
    %v416 = vld [vmem:[%s4] sm:$0x1]
    %v418 = vlaneseq
    %v419 = vshrl.u32 %v418, 7
    %v420 = vsub.s32 0, %v419
    %v421 = vrot.slane %v416, %v420
    %423 = vmatprep.subr.mxu0 0.0
    %424 = vmatpush1.msra.mxu0 %v415
    %425 = vmatprep.subr.mxu0 0.0
    %426 = vmatpush1.msra.mxu0 %v414
    %427 = vmatprep.subr.mxu0 0.0
    %428 = vmatpush1.msra.mxu0 %v413
    %429 = vmatprep.subr.mxu0 0.0
    %430 = vmatpush1.msra.mxu0 %v412
    %431 = vmatprep.subr.mxu0 0.0
    %432 = vmatpush1.msra.mxu0 %v411
    %433 = vmatprep.subr.mxu0 0.0
    %434 = vmatpush1.msra.mxu0 %v410
    %435 = vmatprep.subr.mxu0 0.0
    %436 = vmatpush1.msra.mxu0 %v409
    %437 = vmatprep.subr.mxu0 0.0
    %438 = vmatpush1.msra.mxu0 %v408
    %439 = vmatprep.subr.mxu0 0.0
    %440 = vmatpush1.msra.mxu0 %v407
    %441 = vmatprep.subr.mxu0 0.0
    %442 = vmatpush1.msra.mxu0 %v406
    %443 = vmatprep.subr.mxu0 0.0
    %444 = vmatpush1.msra.mxu0 %v405
    %445 = vmatprep.subr.mxu0 0.0
    %446 = vmatpush1.msra.mxu0 %v404
    %447 = vmatprep.subr.mxu0 0.0
    %448 = vmatpush1.msra.mxu0 %v403
    %449 = vmatprep.subr.mxu0 0.0
    %450 = vmatpush1.msra.mxu0 %v402
    %451 = vmatprep.subr.mxu0 0.0
    %452 = vmatpush1.msra.mxu0 %v401
    %453 = vmatprep.subr.mxu0 0.0
    %454 = vmatpush1.msra.mxu0 %v400
    %455 = vmatprep.subr.mxu0 0.0
    %456 = vmatpush2.msra.mxu0 0.0
    %457 = vmatprep.subr.mxu0 0.0
    %458 = vmatpush2.msra.mxu0 0.0
    %459 = vmatprep.subr.mxu0 0.0
    %460 = vmatpush2.msra.mxu0 0.0
    %461 = vmatprep.subr.mxu0 0.0
    %462 = vmatpush2.msra.mxu0 0.0
    %463 = vmatprep.subr.mxu0 0.0
    %464 = vmatpush2.msra.mxu0 0.0
    %465 = vmatprep.subr.mxu0 0.0
    %466 = vmatpush2.msra.mxu0 0.0
    %467 = vmatprep.subr.mxu0 0.0
    %468 = vmatpush2.msra.mxu0 0.0
    %469 = vmatprep.subr.mxu0 0.0
    %470 = vmatpush2.msra.mxu0 0.0
    %471 = vmatprep.subr.mxu0 0.0
    %472 = vmatpush2.msra.mxu0 0.0
    %473 = vmatprep.subr.mxu0 0.0
    %474 = vmatpush2.msra.mxu0 0.0
    %475 = vmatprep.subr.mxu0 0.0
    %476 = vmatpush2.msra.mxu0 0.0
    %477 = vmatprep.subr.mxu0 0.0
    %478 = vmatpush2.msra.mxu0 0.0
    %479 = vmatprep.subr.mxu0 0.0
    %480 = vmatpush2.msra.mxu0 0.0
    %481 = vmatprep.subr.mxu0 0.0
    %482 = vmatpush2.msra.mxu0 0.0
    %483 = vmatprep.subr.mxu0 0.0
    %484 = vmatpush2.msra.mxu0 0.0
    %485 = vmatprep.subr.mxu0 0.0
    %486 = vmatpush2.msra.mxu0 0.0
    %487 = vmatprep.mubr.f32.mxu0 0.0
    %488 = vmatmul.mubr.f32.gmra.mxu0 %v399
    %v489 = vpop.f32.mrf.mxu0
    %v490 = vadd.f32 %v421, %v489
    %v491 = vpop.f32.mrf.mxu0
    %492 = vdwg.mxu0
    %v493 = vmax.f32 %v490, 0.0
    %v494 = vld [vmem:[#allocation8] sm:$0xff]
    %v495 = vld [vmem:[#allocation8 + $0x8] sm:$0xff]
    %v496 = vld [vmem:[#allocation8 + $0x10] sm:$0xff]
    %v497 = vld [vmem:[#allocation8 + $0x18] sm:$0xff]
    %v498 = vld [vmem:[#allocation8 + $0x20] sm:$0xff]
    %v499 = vld [vmem:[#allocation8 + $0x28] sm:$0xff]
    %v500 = vld [vmem:[#allocation8 + $0x30] sm:$0xff]
    %v501 = vld [vmem:[#allocation8 + $0x38] sm:$0xff]
    %v502 = vld [vmem:[#allocation8 + $0x40] sm:$0xff]
    %v503 = vld [vmem:[#allocation8 + $0x48] sm:$0xff]
    %v504 = vld [vmem:[#allocation8 + $0x50] sm:$0xff]
    %v505 = vld [vmem:[#allocation8 + $0x58] sm:$0xff]
    %v506 = vld [vmem:[#allocation8 + $0x60] sm:$0xff]
    %v507 = vld [vmem:[#allocation8 + $0x68] sm:$0xff]
    %v508 = vld [vmem:[#allocation8 + $0x70] sm:$0xff]
    %v509 = vld [vmem:[#allocation8 + $0x78] sm:$0xff]
    %v510 = vld [vmem:[%s6] sm:$0x1]
    %v512 = vlaneseq
    %v513 = vshrl.u32 %v512, 7
    %v514 = vsub.s32 0, %v513
    %v515 = vrot.slane %v510, %v514
    %517 = vmatprep.subr.mxu0 0.0
    %518 = vmatpush1.msra.mxu0 %v509
    %519 = vmatprep.subr.mxu0 0.0
    %520 = vmatpush1.msra.mxu0 %v508
    %521 = vmatprep.subr.mxu0 0.0
    %522 = vmatpush1.msra.mxu0 %v507
    %523 = vmatprep.subr.mxu0 0.0
    %524 = vmatpush1.msra.mxu0 %v506
    %525 = vmatprep.subr.mxu0 0.0
    %526 = vmatpush1.msra.mxu0 %v505
    %527 = vmatprep.subr.mxu0 0.0
    %528 = vmatpush1.msra.mxu0 %v504
    %529 = vmatprep.subr.mxu0 0.0
    %530 = vmatpush1.msra.mxu0 %v503
    %531 = vmatprep.subr.mxu0 0.0
    %532 = vmatpush1.msra.mxu0 %v502
    %533 = vmatprep.subr.mxu0 0.0
    %534 = vmatpush1.msra.mxu0 %v501
    %535 = vmatprep.subr.mxu0 0.0
    %536 = vmatpush1.msra.mxu0 %v500
    %537 = vmatprep.subr.mxu0 0.0
    %538 = vmatpush1.msra.mxu0 %v499
    %539 = vmatprep.subr.mxu0 0.0
    %540 = vmatpush1.msra.mxu0 %v498
    %541 = vmatprep.subr.mxu0 0.0
    %542 = vmatpush1.msra.mxu0 %v497
    %543 = vmatprep.subr.mxu0 0.0
    %544 = vmatpush1.msra.mxu0 %v496
    %545 = vmatprep.subr.mxu0 0.0
    %546 = vmatpush1.msra.mxu0 %v495
    %547 = vmatprep.subr.mxu0 0.0
    %548 = vmatpush1.msra.mxu0 %v494
    %549 = vmatprep.subr.mxu0 0.0
    %550 = vmatpush2.msra.mxu0 0.0
    %551 = vmatprep.subr.mxu0 0.0
    %552 = vmatpush2.msra.mxu0 0.0
    %553 = vmatprep.subr.mxu0 0.0
    %554 = vmatpush2.msra.mxu0 0.0
    %555 = vmatprep.subr.mxu0 0.0
    %556 = vmatpush2.msra.mxu0 0.0
    %557 = vmatprep.subr.mxu0 0.0
    %558 = vmatpush2.msra.mxu0 0.0
    %559 = vmatprep.subr.mxu0 0.0
    %560 = vmatpush2.msra.mxu0 0.0
    %561 = vmatprep.subr.mxu0 0.0
    %562 = vmatpush2.msra.mxu0 0.0
    %563 = vmatprep.subr.mxu0 0.0
    %564 = vmatpush2.msra.mxu0 0.0
    %565 = vmatprep.subr.mxu0 0.0
    %566 = vmatpush2.msra.mxu0 0.0
    %567 = vmatprep.subr.mxu0 0.0
    %568 = vmatpush2.msra.mxu0 0.0
    %569 = vmatprep.subr.mxu0 0.0
    %570 = vmatpush2.msra.mxu0 0.0
    %571 = vmatprep.subr.mxu0 0.0
    %572 = vmatpush2.msra.mxu0 0.0
    %573 = vmatprep.subr.mxu0 0.0
    %574 = vmatpush2.msra.mxu0 0.0
    %575 = vmatprep.subr.mxu0 0.0
    %576 = vmatpush2.msra.mxu0 0.0
    %577 = vmatprep.subr.mxu0 0.0
    %578 = vmatpush2.msra.mxu0 0.0
    %579 = vmatprep.subr.mxu0 0.0
    %580 = vmatpush2.msra.mxu0 0.0
    %581 = vmatprep.mubr.f32.mxu0 0.0
    %582 = vmatmul.mubr.f32.gmra.mxu0 %v493
    %v583 = vpop.f32.mrf.mxu0
    %v584 = vadd.f32 %v515, %v583
    %v585 = vpop.f32.mrf.mxu0
    %586 = vdwg.mxu0
    %587 = vst [vmem:[#allocation10] sm:$0xff] %v584
    // Predicated region
    $region46: #{tpu_custom_call.1} parent=1 // pred_check
      _
    $region47: #{tpu_custom_call.1} parent=1 // pred_check_branch
      %589 = sbr.rel (0) target = $region49
    $region48: #{tpu_custom_call.1} parent=1 // pred_region
      %s591 = ssub.s32 128, 128
      %592 = vsyncadd [#allocation4], %s591
      %s594 = sshll.u32 [#allocation10], 4
      %s595 = int_to_ptr.vmem [resolvable:$true] %s594
      %597 = dma.vmem_to_hbm [thread:$0]  %s595, 128, %s7, [#allocation4]
    $region49: #{tpu_custom_call.1} parent=1 // pred_fallthru
      _
    // Predicated region
    $region50: #{tpu_custom_call.1} parent=1 // pred_check
      _
    $region51: #{tpu_custom_call.1} parent=1 // pred_check_branch
      %599 = sbr.rel (0) target = $region53
    $region52: #{tpu_custom_call.1} parent=1 // pred_region
      %600 = dma.done [#allocation4], 128
    $region53: #{tpu_custom_call.1} parent=1 // pred_fallthru
      _
    %601 = vsyncpa [#allocation3], 1
    %602 = vsyncpa [#allocation6], 1
    %603 = vsyncpa [#allocation9], 1
    %604 = vsyncpa [#allocation4], 1

</llo_original>
